<compile_context>
chip_gen: v7x
topology: tpu7x:2x2x1
jax: 0.10.0
libtpu: 0.0.40
codegen_flags: <defaults>
</compile_context>

<pallas_src>
import math

import jax
import jax.numpy as jnp
from jax.experimental import pallas as pl
from jax.experimental.pallas import tpu as pltpu


# ---------------------------------------------------------------------------
# torch.view semantics: resolve a single -1 and validate the element count.
# ---------------------------------------------------------------------------
def _resolve_target_shape(target_shape, f):
    tgt = list(target_shape)
    n_neg = tgt.count(-1)
    if n_neg > 1:
        raise ValueError("at most one -1 is allowed in the target shape")
    if n_neg == 1:
        known = math.prod(d for d in tgt if d != -1)
        if known == 0 or f % known != 0:
            raise ValueError(
                f"cannot infer -1: {f} elements per row not divisible by {known}")
        tgt[tgt.index(-1)] = f // known
    if math.prod(tgt) != f:
        raise ValueError(
            f"target shape {tuple(tgt)} incompatible with {f} elements per batch row")
    return tuple(tgt)


# ---------------------------------------------------------------------------
# Kernels
# ---------------------------------------------------------------------------
def _alias_noop_kernel(x_hbm_ref, o_hbm_ref):
    # Output aliases input and the bytes are already at the right HBM
    # addresses: a .view() needs no data movement, so the body is empty and
    # no HBM<->VMEM DMA is generated.
    del x_hbm_ref, o_hbm_ref


def _copy_kernel(x_ref, o_ref):
    # Identity copy of one lane-dense block (only used on the copy=True path).
    o_ref[...] = x_ref[...]


# ---------------------------------------------------------------------------
# Helpers
# ---------------------------------------------------------------------------
def _sublane(dtype):
    # Sublane packing: 8 rows (f32), 16 (bf16/f16), 32 (int8/fp8).
    return max(8, 32 // jnp.dtype(dtype).itemsize)


def _round_up(n, m):
    return -(-n // m) * m


def _block_budget_bytes():
    """Per-block byte budget, chosen per TPU generation (review feedback)."""
    try:
        kind = jax.devices()[0].device_kind.lower()
    except Exception:  # pragma: no cover - defensive
        kind = ""
    if "v7" in kind or "7x" in kind:
        return 8 * 1024 * 1024   # v7x: big blocks amortize per-step overhead
    if "v6" in kind:
        return 4 * 1024 * 1024   # v6e: 16 MiB of pipeline buffers, within 32 MiB
    return 2 * 1024 * 1024       # v5e / unknown: conservative


# ---------------------------------------------------------------------------
# Zero-copy path (default): pallas_call shell, no DMA, metadata-only reshape.
# ---------------------------------------------------------------------------
def _reshape_zero_copy(x, out_shape):
    out = pl.pallas_call(
        _alias_noop_kernel,
        out_shape=jax.ShapeDtypeStruct(x.shape, x.dtype),
        in_specs=[pl.BlockSpec(memory_space=pl.ANY)],
        out_specs=pl.BlockSpec(memory_space=pl.ANY),
        input_output_aliases={0: 0},     # output IS the input buffer
    )(x)
    return out.reshape(out_shape)        # metadata-only reshape


# ---------------------------------------------------------------------------
# Materializing copy path (copy=True): lane-dense tiled identity copy.
# ---------------------------------------------------------------------------
def _reshape_copy(x, out_shape):
    b = x.shape[0]
    total = math.prod(x.shape)
    dtype_bytes = jnp.dtype(x.dtype).itemsize
    sub = _sublane(x.dtype)
    block_bytes = _block_budget_bytes()

    # Scoped VMEM: 2 buffers x (in + out) x block, plus headroom for Mosaic's
    # internal scratch.  48 MiB on v7x (64 MiB physical), 32 MiB on v6e,
    # 24 MiB on v5e (128 MiB physical) — safe on every generation.
    vmem_limit = 4 * block_bytes + (16 << 20)
    cparams = pltpu.CompilerParams(
        dimension_semantics=("parallel",),   # shards grid across v7x's 2 TCs
        vmem_limit_bytes=vmem_limit,
    )
    cost = pl.CostEstimate(flops=0, transcendentals=0,
                           bytes_accessed=2 * total * dtype_bytes)

    # Lane-dense slab layout (rows, cols) with cols a multiple of 128.
    cols = next((c for c in (1024, 512, 256, 128) if total % c == 0), None)

    if cols is not None:
        rows = total // cols
        row_bytes = cols * dtype_bytes
        cap = max(sub, (block_bytes // row_bytes) // sub * sub)
        if rows <= cap:
            if rows >= 2 * sub:
                # Split into >= 2 grid steps so both v7x TensorCores run.
                block_rows = _round_up(pl.cdiv(rows, 2), sub)
            else:
                block_rows = rows            # full extent: single small block
        else:
            block_rows = cap
            # Prefer a sublane-multiple divisor of rows (no masked tail tile)
            # without giving up more than half the block size.
            for cand in range(cap, cap // 2 - 1, -sub):
                if cand > 0 and rows % cand == 0:
                    block_rows = cand
                    break

        x_slab = x.reshape(rows, cols)       # metadata-only flatten
        out = pl.pallas_call(
            _copy_kernel,
            out_shape=jax.ShapeDtypeStruct((rows, cols), x.dtype),
            grid=(pl.cdiv(rows, block_rows),),
            in_specs=[pl.BlockSpec((block_rows, cols), lambda i: (i, 0))],
            out_specs=pl.BlockSpec((block_rows, cols), lambda i: (i, 0)),
            input_output_aliases={0: 0},     # pays off only if x is donated
            compiler_params=cparams,
            cost_estimate=cost,
        )(x_slab)
        return out.reshape(out_shape)

    # Non-128-aligned element count: tile the (b, f) view over batch rows with
    # a full-extent last dim (satisfies the (8,128) rule), so VMEM stays
    # bounded and the pipeline stays active even for large unaligned inputs.
    f = total // b
    x2d = x.reshape(b, f)
    row_bytes = f * dtype_bytes
    cap_b = max(1, block_bytes // max(1, row_bytes))
    if cap_b >= b:
        block_b = b if b < 2 * sub else _round_up(pl.cdiv(b, 2), sub)
    else:
        block_b = max(sub, (cap_b // sub) * sub) if b > sub else b
    block_b = min(block_b, b)
    # TODO(synk): a single unaligned row larger than the VMEM budget (tiny b,
    # huge f with f % 128 != 0) would need a pad-to-128 + slice path.
    out = pl.pallas_call(
        _copy_kernel,
        out_shape=jax.ShapeDtypeStruct((b, f), x.dtype),
        grid=(pl.cdiv(b, block_b),),
        in_specs=[pl.BlockSpec((block_b, f), lambda i: (i, 0))],
        out_specs=pl.BlockSpec((block_b, f), lambda i: (i, 0)),
        input_output_aliases={0: 0},
        compiler_params=cparams,
        cost_estimate=cost,
    )(x2d)
    return out.reshape(out_shape)


# ---------------------------------------------------------------------------
# Public wrapper: Reshape(*target_shape)(x) == x.view(x.size(0), *target_shape)
# ---------------------------------------------------------------------------
def reshape_pallas(x, target_shape, *, copy=False):
    """Pallas equivalent of the PyTorch `Reshape` module's forward pass.

    copy=False (default): zero-copy.  A pallas_call shell whose output aliases
        the input (memory_space=pl.ANY, empty body — no DMA), followed by a
        metadata-only reshape.  A .view() moves no data; neither do we.
    copy=True: materializes a fresh buffer with a lane-dense tiled identity
        copy near the HBM roofline (generation-aware block sizing).

    NOTE: input_output_aliases={0: 0} only reuses x's buffer if the caller
    donates x (jax.jit(..., donate_argnums=...)); otherwise XLA inserts a
    defensive copy of x before the kernel (results remain correct).
    """
    b = x.shape[0]
    f = math.prod(x.shape[1:])
    tgt = _resolve_target_shape(target_shape, f)
    out_shape = (b,) + tgt
    if math.prod(out_shape) == 0:
        return x.reshape(out_shape)
    if copy:
        return _reshape_copy(x, out_shape)
    return _reshape_zero_copy(x, out_shape)


if __name__ == "__main__":
    key = jax.random.PRNGKey(0)

    # Module configured as Reshape(16, 8, 8) on an NCHW-like input:
    # batch=2, channels=4, spatial=16x16 -> 4*16*16 = 1024 = 16*8*8.
    x = jax.random.normal(key, (2, 4, 16, 16), dtype=jnp.float32)
    target_shape = (16, 8, 8)
    y_ref = x.reshape(x.shape[0], *target_shape)

    # Default zero-copy path (pallas_call shell, no DMA).
    y0 = jax.block_until_ready(reshape_pallas(x, target_shape))
    assert y0.shape == (2, 16, 8, 8)
    assert jnp.array_equal(y0, y_ref)

    # Materializing copy path (tiled, lane-dense, 128-aligned).
    y1 = jax.block_until_ready(reshape_pallas(x, target_shape, copy=True))
    assert y1.shape == (2, 16, 8, 8)
    assert jnp.array_equal(y1, y_ref)

    # -1 inference + non-128-aligned fallback (tiled over batch rows).
    x2 = jax.random.normal(jax.random.PRNGKey(1), (2, 3, 5, 7), dtype=jnp.float32)
    y2_ref = x2.reshape(2, 15, 7)
    y2a = jax.block_until_ready(reshape_pallas(x2, (-1, 7)))
    y2b = jax.block_until_ready(reshape_pallas(x2, (-1, 7), copy=True))
    assert y2a.shape == (2, 15, 7) and jnp.array_equal(y2a, y2_ref)
    assert y2b.shape == (2, 15, 7) and jnp.array_equal(y2b, y2_ref)

    # bf16: exercises dtype-aware sublane handling in the copy path.
    x3 = jax.random.normal(jax.random.PRNGKey(2), (8, 16, 32)).astype(jnp.bfloat16)
    y3_ref = x3.reshape(8, 512)
    y3 = jax.block_until_ready(reshape_pallas(x3, (512,), copy=True))
    assert y3.shape == (8, 512) and jnp.array_equal(y3, y3_ref)

    print("KERNEL_OK")
</pallas_src>

<mosaic_0001>
module attributes {stable_mosaic.version = 11 : i64} {
  func.func @_alias_noop_kernel(%arg0: memref<2x4x16x16xf32, #tpu.memory_space<any>>, %arg1: memref<2x4x16x16xf32, #tpu.memory_space<any>>) attributes {dimension_semantics = [], scalar_prefetch = 0 : i64, scratch_operands = 0 : i64, tpu.core_type = #tpu.core_type<tc>} {
    return
  }
}

</mosaic_0001>

<llo_original>
// kernel: tpu_custom_call.1
$region0: #{tpu_custom_call.1}
  #allocation0 [shape = 'u32[]', space=smem, size = 0x4, offset = 0x4, fixed_abs, tag = 'smem constant byte address 0x4 - core index']
  #allocation1 [shape = 'u32[144,128]{1,0:T(1,128)}', space=vmem, size = 0x12000, scoped, tag = 'internal scratch']
  %s0 = inlined_call_operand.hbm [shape: f32[2,4,16,16], index: 0, kind: input, shape index: {}, may-alias: {0,1}]
  %s1 = inlined_call_operand.hbm [shape: f32[2,4,16,16], index: 1, kind: output, shape index: {}, may-alias: {0,1}]
  %s2 = sld [smem:[#allocation0]]
  $region2: #{tpu_custom_call.1} parent=0
    _
  %s4 = ssub.s32 1, %s2
  %s5 = scalar_select 0, %s4, %s2

</llo_original>
